<compile_context>
chip_gen: v7x
topology: tpu7x:2x2x1
jax: 0.10.0
libtpu: 0.0.40
codegen_flags: <defaults>
</compile_context>

<pallas_src>
import functools

import numpy as np

import jax
import jax.numpy as jnp
from jax import lax
from jax.experimental import pallas as pl
from jax.experimental.pallas import tpu as pltpu

GN_EPS = 1e-5  # nn.GroupNorm default eps (the module's EPS=1e-12 is unused here)


def _fused_residual_block_kernel(x_ref, mask_ref, wb_ref, aff_ref, wp_ref,
                                 bk_ref, o_ref, *, taps, tfp, cnt):
    """Fused: 1x1 bottleneck conv -> GroupNorm(1) -> pad(mask) -> skip conv.

    x_ref   : (1, C, W)  zero-extended, flattened (T, Fp) input sample
    mask_ref: (1, W)     1.0 on real (non-pad, non-extension) columns
    wb_ref  : (Hc, C)    bottleneck 1x1 weight
    aff_ref : (Hc, 3)    [bottleneck bias | gn gamma | gn beta]
    wp_ref  : (S, kh*kw*Hc) packed skip-conv weight (im2col layout)
    bk_ref  : (S, 1)     skip-conv bias
    o_ref   : (1, S, T*Fp) full-width conv result (cropped in the wrapper)
    """
    x = x_ref[0]                                    # (C, W)
    mask = mask_ref[...]                            # (1, W), sublane-broadcast
    aff = aff_ref[...]                              # (Hc, 3)

    # ---- 1x1 bottleneck conv: one (Hc, C) x (C, W) MXU matmul per sample ----
    y = jnp.dot(wb_ref[...], x, preferred_element_type=jnp.float32)
    y = y + aff[:, 0:1]                             # + bottleneck bias
    ym = y * mask                                   # zero pad/extension columns

    # ---- GroupNorm(1, Hc): single-pass stats over the real T*F elements -----
    s1 = jnp.sum(ym)
    s2 = jnp.sum(ym * ym)
    mean = s1 / cnt
    var = s2 / cnt - mean * mean
    inv = lax.rsqrt(var + GN_EPS)
    scale = aff[:, 1:2] * inv                       # (Hc, 1)
    shift = aff[:, 2:3] - mean * scale              # (Hc, 1)
    z = (ym * scale + shift) * mask                 # normalized; pads back to 0

    # ---- skip conv as im2col: one (S, kh*kw*Hc) x (kh*kw*Hc, T*Fp) matmul ----
    cols = jnp.concatenate([z[:, s:s + tfp] for s in taps], axis=0)
    out = jnp.dot(wp_ref[...], cols, preferred_element_type=jnp.float32)
    o_ref[0] = out + bk_ref[...]


def residual_block2d_forward(x, params, *, kernel_size=(2, 3), stride=1,
                             dilation=(1, 1), causal=True):
    """Forward of ResidualBlock2d (separable=False, nonlinear=None, norm=True,
    dual_head=False). Returns (output=None, skip)."""
    wb = params["bottleneck_w"]; bb = params["bottleneck_b"]
    gamma = params["gn_weight"]; beta = params["gn_bias"]
    wk = params["skip_w"]; bk = params["skip_b"]

    N, C, T, F = x.shape
    Hc = wb.shape[0]
    S = wk.shape[0]
    kh, kw = kernel_size
    dh, dw = dilation

    # Padding exactly as the reference (computed from T, applied to last dim).
    padding = (T - 1) * stride - T + (kh - 1) * dh + 1
    if causal:
        pad_l, pad_r = padding, 0
    else:
        pad_l = padding // 2
        pad_r = padding - pad_l

    Fp = F + pad_l + pad_r
    TFp = T * Fp
    t_out = T - (kh - 1) * dh
    f_out = Fp - (kw - 1) * dw
    s_max = (kh - 1) * dh * Fp + (kw - 1) * dw      # largest tap lane-shift
    W = TFp + s_max                                 # zero-extended flat width
    taps = tuple(i * dh * Fp + j * dw for i in range(kh) for j in range(kw))

    # Tiny wrapper-side prep on the INPUT (C channels): pad feat, flatten
    # (T, Fp) -> T*Fp, zero-extend by s_max so each tap window is a plain
    # static lane slice inside the kernel. (The pre-padded zeros do not yield
    # zeros after conv+bias+norm, hence the mask below.)
    x_p = jnp.pad(x, ((0, 0), (0, 0), (0, 0), (pad_l, pad_r)))
    x_ext = jnp.pad(x_p.reshape(N, C, TFp), ((0, 0), (0, 0), (0, s_max)))

    # Mask of "real" columns: used for GroupNorm statistics and to zero the
    # padded columns before the skip conv (matches the reference F.pad).
    col = np.arange(W)
    real = (col < TFp) & ((col % Fp) >= pad_l) & ((col % Fp) < pad_l + F)
    mask = jnp.asarray(real.astype(np.float32)).reshape(1, W)

    # Pack per-channel params into one block; pack conv weights for im2col:
    # wp[s, (i*kw + j)*Hc + h] = wk[s, h, i, j].
    affine = jnp.stack([bb, gamma, beta], axis=1)                  # (Hc, 3)
    wp = wk.transpose(2, 3, 0, 1).reshape(kh * kw, S, Hc)
    wp = wp.transpose(1, 0, 2).reshape(S, kh * kw * Hc)            # (S, kh*kw*Hc)
    bkv = bk.reshape(S, 1)

    kernel = functools.partial(_fused_residual_block_kernel,
                               taps=taps, tfp=TFp, cnt=float(Hc * T * F))

    out_full = pl.pallas_call(
        kernel,
        out_shape=jax.ShapeDtypeStruct((N, S, TFp), jnp.float32),
        grid=(N,),
        in_specs=[
            pl.BlockSpec((1, C, W), lambda n: (n, 0, 0)),
            pl.BlockSpec((1, W), lambda n: (0, 0)),
            pl.BlockSpec((Hc, C), lambda n: (0, 0)),
            pl.BlockSpec((Hc, 3), lambda n: (0, 0)),
            pl.BlockSpec((S, kh * kw * Hc), lambda n: (0, 0)),
            pl.BlockSpec((S, 1), lambda n: (0, 0)),
        ],
        out_specs=pl.BlockSpec((1, S, TFp), lambda n: (n, 0, 0)),
        compiler_params=pltpu.CompilerParams(
            dimension_semantics=("parallel",)),
    )(x_ext, mask, wb, affine, wp, bkv)

    # Crop the lane-dense full-width result to the VALID conv output.
    skip = out_full.reshape(N, S, T, Fp)[:, :, :t_out, :f_out]
    return None, skip   # dual_head=False -> output head is None


# ------------------------------ pure-JAX reference ---------------------------
def _reference_forward(x, params, *, kernel_size=(2, 3), stride=1,
                       dilation=(1, 1), causal=True):
    wb = params["bottleneck_w"]; bb = params["bottleneck_b"]
    gamma = params["gn_weight"]; beta = params["gn_bias"]
    wk = params["skip_w"]; bk = params["skip_b"]
    N, C, T, F = x.shape
    kh, kw = kernel_size
    dh, dw = dilation
    y = jnp.einsum("hc,nctf->nhtf", wb, x) + bb[None, :, None, None]
    mu = jnp.mean(y, axis=(1, 2, 3), keepdims=True)
    var = jnp.mean((y - mu) ** 2, axis=(1, 2, 3), keepdims=True)
    y = (y - mu) / jnp.sqrt(var + GN_EPS)
    y = y * gamma[None, :, None, None] + beta[None, :, None, None]
    padding = (T - 1) * stride - T + (kh - 1) * dh + 1
    pad_l, pad_r = (padding, 0) if causal else (padding // 2, padding - padding // 2)
    xp = jnp.pad(y, ((0, 0), (0, 0), (0, 0), (pad_l, pad_r)))
    skip = lax.conv_general_dilated(
        xp, wk, window_strides=(1, 1), padding="VALID",
        rhs_dilation=(dh, dw),
        dimension_numbers=("NCHW", "OIHW", "NCHW")) + bk[None, :, None, None]
    return None, skip


if __name__ == "__main__":
    # Small deterministic config.
    N, C, T, F = 2, 8, 16, 16          # batch, num_features, T_original, feat
    Hc, S = 16, 16                     # hidden_channels, skip_channels
    kernel_size, dilation = (2, 3), (1, 1)

    key = jax.random.PRNGKey(0)
    k = jax.random.split(key, 7)
    x = jax.random.normal(k[0], (N, C, T, F), dtype=jnp.float32)
    params = {
        "bottleneck_w": jax.random.normal(k[1], (Hc, C), jnp.float32) * 0.2,
        "bottleneck_b": jax.random.normal(k[2], (Hc,), jnp.float32) * 0.1,
        "gn_weight": 1.0 + 0.1 * jax.random.normal(k[3], (Hc,), jnp.float32),
        "gn_bias": 0.1 * jax.random.normal(k[4], (Hc,), jnp.float32),
        "skip_w": jax.random.normal(k[5], (S, Hc) + kernel_size, jnp.float32) * 0.2,
        "skip_b": jax.random.normal(k[6], (S,), jnp.float32) * 0.1,
    }

    out, skip = residual_block2d_forward(x, params, kernel_size=kernel_size,
                                         dilation=dilation)
    skip = jax.block_until_ready(skip)

    out_ref, skip_ref = _reference_forward(x, params, kernel_size=kernel_size,
                                           dilation=dilation)
    assert out is None and out_ref is None
    assert skip.shape == skip_ref.shape, (skip.shape, skip_ref.shape)
    max_err = float(jnp.max(jnp.abs(skip - skip_ref)))
    assert jnp.allclose(skip, skip_ref, rtol=1e-4, atol=1e-4), max_err

    print("KERNEL_OK")
</pallas_src>

<mosaic_0001>
module attributes {stable_mosaic.version = 11 : i64} {
  func.func @_fused_residual_block_kernel(%arg0: i32, %arg1: memref<1x8x291xf32, #tpu.memory_space<vmem>>, %arg2: memref<1x291xf32, #tpu.memory_space<vmem>>, %arg3: memref<16x8xf32, #tpu.memory_space<vmem>>, %arg4: memref<16x3xf32, #tpu.memory_space<vmem>>, %arg5: memref<16x96xf32, #tpu.memory_space<vmem>>, %arg6: memref<16x1xf32, #tpu.memory_space<vmem>>, %arg7: memref<1x16x272xf32, #tpu.memory_space<vmem>>) attributes {dimension_semantics = [#tpu.dimension_semantics<parallel>], iteration_bounds = array<i64: 2>, scalar_prefetch = 0 : i64, scratch_operands = 0 : i64, tpu.core_type = #tpu.core_type<tc>, window_params = [{transform_indices = @transform_0, window_bounds = array<i64: 1, 8, 291>}, {pipeline_mode = #tpu.pipeline_mode<synchronous>, transform_indices = @transform_1, window_bounds = array<i64: 1, 291>}, {pipeline_mode = #tpu.pipeline_mode<synchronous>, transform_indices = @transform_2, window_bounds = array<i64: 16, 8>}, {pipeline_mode = #tpu.pipeline_mode<synchronous>, transform_indices = @transform_3, window_bounds = array<i64: 16, 3>}, {pipeline_mode = #tpu.pipeline_mode<synchronous>, transform_indices = @transform_4, window_bounds = array<i64: 16, 96>}, {pipeline_mode = #tpu.pipeline_mode<synchronous>, transform_indices = @transform_5, window_bounds = array<i64: 16, 1>}, {transform_indices = @transform_6, window_bounds = array<i64: 1, 16, 272>}]} {
    %c0 = arith.constant 0 : index
    %c0_0 = arith.constant 0 : index
    %c0_1 = arith.constant 0 : index
    %0 = vector.load %arg1[%c0, %c0_0, %c0_1] : memref<1x8x291xf32, #tpu.memory_space<vmem>>, vector<1x8x291xf32>
    %1 = vector.shape_cast %0 : vector<1x8x291xf32> to vector<8x291xf32>
    %c0_2 = arith.constant 0 : index
    %c0_3 = arith.constant 0 : index
    %2 = vector.load %arg2[%c0_2, %c0_3] : memref<1x291xf32, #tpu.memory_space<vmem>>, vector<1x291xf32>
    %c0_4 = arith.constant 0 : index
    %c0_5 = arith.constant 0 : index
    %3 = vector.load %arg4[%c0_4, %c0_5] : memref<16x3xf32, #tpu.memory_space<vmem>>, vector<16x3xf32>
    %c0_6 = arith.constant 0 : index
    %c0_7 = arith.constant 0 : index
    %4 = vector.load %arg3[%c0_6, %c0_7] : memref<16x8xf32, #tpu.memory_space<vmem>>, vector<16x8xf32>
    %cst = arith.constant dense<0.000000e+00> : vector<16x291xf32>
    %5 = tpu.matmul %4, %1, %cst {dimension_numbers = #tpu.dot_dimension_numbers<[1], [0], [0], [1], [0, 0, 1, 1], [], []>} : vector<16x8xf32>, vector<8x291xf32>, vector<16x291xf32> -> vector<16x291xf32>
    %6 = vector.extract_strided_slice %3 {offsets = [0, 0], sizes = [16, 1], strides = [1, 1]} : vector<16x3xf32> to vector<16x1xf32>
    %7 = vector.broadcast %6 : vector<16x1xf32> to vector<16x291xf32>
    %8 = arith.addf %5, %7 : vector<16x291xf32>
    %9 = vector.broadcast %2 : vector<1x291xf32> to vector<16x291xf32>
    %10 = arith.mulf %8, %9 : vector<16x291xf32>
    %11 = vector.shape_cast %10 : vector<16x291xf32> to vector<1x16x291xf32>
    %cst_8 = arith.constant dense<0.000000e+00> : vector<1xf32>
    %12 = vector.multi_reduction <add>, %11, %cst_8 [1, 2] : vector<1x16x291xf32> to vector<1xf32>
    %13 = vector.shape_cast %12 : vector<1xf32> to vector<1x1x1xf32>
    %14 = vector.extract %13[0, 0, 0] : f32 from vector<1x1x1xf32>
    %15 = arith.mulf %10, %10 : vector<16x291xf32>
    %16 = vector.shape_cast %15 : vector<16x291xf32> to vector<1x16x291xf32>
    %cst_9 = arith.constant dense<0.000000e+00> : vector<1xf32>
    %17 = vector.multi_reduction <add>, %16, %cst_9 [1, 2] : vector<1x16x291xf32> to vector<1xf32>
    %18 = vector.shape_cast %17 : vector<1xf32> to vector<1x1x1xf32>
    %19 = vector.extract %18[0, 0, 0] : f32 from vector<1x1x1xf32>
    %cst_10 = arith.constant 4.096000e+03 : f32
    %20 = arith.divf %14, %cst_10 : f32
    %cst_11 = arith.constant 4.096000e+03 : f32
    %21 = arith.divf %19, %cst_11 : f32
    %22 = arith.mulf %20, %20 : f32
    %23 = arith.subf %21, %22 : f32
    %cst_12 = arith.constant 9.99999974E-6 : f32
    %24 = arith.addf %23, %cst_12 : f32
    %25 = math.rsqrt %24 : f32
    %26 = vector.extract_strided_slice %3 {offsets = [0, 1], sizes = [16, 1], strides = [1, 1]} : vector<16x3xf32> to vector<16x1xf32>
    %27 = vector.broadcast %25 : f32 to vector<16x1xf32>
    %28 = arith.mulf %26, %27 : vector<16x1xf32>
    %29 = vector.extract_strided_slice %3 {offsets = [0, 2], sizes = [16, 1], strides = [1, 1]} : vector<16x3xf32> to vector<16x1xf32>
    %30 = vector.broadcast %20 : f32 to vector<16x1xf32>
    %31 = arith.mulf %30, %28 : vector<16x1xf32>
    %32 = arith.subf %29, %31 : vector<16x1xf32>
    %33 = vector.broadcast %28 : vector<16x1xf32> to vector<16x291xf32>
    %34 = arith.mulf %10, %33 : vector<16x291xf32>
    %35 = vector.broadcast %32 : vector<16x1xf32> to vector<16x291xf32>
    %36 = arith.addf %34, %35 : vector<16x291xf32>
    %37 = vector.broadcast %2 : vector<1x291xf32> to vector<16x291xf32>
    %38 = arith.mulf %36, %37 : vector<16x291xf32>
    %39 = vector.extract_strided_slice %38 {offsets = [0, 0], sizes = [16, 272], strides = [1, 1]} : vector<16x291xf32> to vector<16x272xf32>
    %40 = vector.extract_strided_slice %38 {offsets = [0, 1], sizes = [16, 272], strides = [1, 1]} : vector<16x291xf32> to vector<16x272xf32>
    %41 = vector.extract_strided_slice %38 {offsets = [0, 2], sizes = [16, 272], strides = [1, 1]} : vector<16x291xf32> to vector<16x272xf32>
    %42 = vector.extract_strided_slice %38 {offsets = [0, 17], sizes = [16, 272], strides = [1, 1]} : vector<16x291xf32> to vector<16x272xf32>
    %43 = vector.extract_strided_slice %38 {offsets = [0, 18], sizes = [16, 272], strides = [1, 1]} : vector<16x291xf32> to vector<16x272xf32>
    %44 = vector.extract_strided_slice %38 {offsets = [0, 19], sizes = [16, 272], strides = [1, 1]} : vector<16x291xf32> to vector<16x272xf32>
    %45 = tpu.concatenate %39, %40, %41, %42, %43, %44 in 0 : vector<16x272xf32>, vector<16x272xf32>, vector<16x272xf32>, vector<16x272xf32>, vector<16x272xf32>, vector<16x272xf32> -> vector<96x272xf32>
    %c0_13 = arith.constant 0 : index
    %c0_14 = arith.constant 0 : index
    %46 = vector.load %arg5[%c0_13, %c0_14] : memref<16x96xf32, #tpu.memory_space<vmem>>, vector<16x96xf32>
    %cst_15 = arith.constant dense<0.000000e+00> : vector<16x272xf32>
    %47 = tpu.matmul %46, %45, %cst_15 {dimension_numbers = #tpu.dot_dimension_numbers<[1], [0], [0], [1], [0, 0, 1, 1], [], []>} : vector<16x96xf32>, vector<96x272xf32>, vector<16x272xf32> -> vector<16x272xf32>
    %c0_16 = arith.constant 0 : index
    %c0_17 = arith.constant 0 : index
    %48 = vector.load %arg6[%c0_16, %c0_17] : memref<16x1xf32, #tpu.memory_space<vmem>>, vector<16x1xf32>
    %49 = vector.broadcast %48 : vector<16x1xf32> to vector<16x272xf32>
    %50 = arith.addf %47, %49 : vector<16x272xf32>
    %c0_18 = arith.constant 0 : index
    %c0_19 = arith.constant 0 : index
    %c0_20 = arith.constant 0 : index
    %51 = vector.load %arg7[%c0_18, %c0_19, %c0_20] : memref<1x16x272xf32, #tpu.memory_space<vmem>>, vector<1x16x272xf32>
    %52 = vector.shape_cast %51 : vector<1x16x272xf32> to vector<16x272xf32>
    %53 = vector.shape_cast %50 : vector<16x272xf32> to vector<1x16x272xf32>
    tpu.vector_store %arg7[%c0_18, %c0_19, %c0_20], %53 {strides = array<i32>} : memref<1x16x272xf32, #tpu.memory_space<vmem>>, vector<1x16x272xf32>,
    return
  }
  func.func @transform_0(%arg0: i32) -> (i32, i32, i32) {
    %c0_i32 = arith.constant 0 : i32
    %c0_i32_0 = arith.constant 0 : i32
    %c0_i32_1 = arith.constant 0 : i32
    return %arg0, %c0_i32, %c0_i32_0 : i32, i32, i32
  }
  func.func @transform_1(%arg0: i32) -> (i32, i32) {
    %c0_i32 = arith.constant 0 : i32
    %c0_i32_0 = arith.constant 0 : i32
    %c0_i32_1 = arith.constant 0 : i32
    return %c0_i32, %c0_i32_0 : i32, i32
  }
  func.func @transform_2(%arg0: i32) -> (i32, i32) {
    %c0_i32 = arith.constant 0 : i32
    %c0_i32_0 = arith.constant 0 : i32
    %c0_i32_1 = arith.constant 0 : i32
    return %c0_i32, %c0_i32_0 : i32, i32
  }
  func.func @transform_3(%arg0: i32) -> (i32, i32) {
    %c0_i32 = arith.constant 0 : i32
    %c0_i32_0 = arith.constant 0 : i32
    %c0_i32_1 = arith.constant 0 : i32
    return %c0_i32, %c0_i32_0 : i32, i32
  }
  func.func @transform_4(%arg0: i32) -> (i32, i32) {
    %c0_i32 = arith.constant 0 : i32
    %c0_i32_0 = arith.constant 0 : i32
    %c0_i32_1 = arith.constant 0 : i32
    return %c0_i32, %c0_i32_0 : i32, i32
  }
  func.func @transform_5(%arg0: i32) -> (i32, i32) {
    %c0_i32 = arith.constant 0 : i32
    %c0_i32_0 = arith.constant 0 : i32
    %c0_i32_1 = arith.constant 0 : i32
    return %c0_i32, %c0_i32_0 : i32, i32
  }
  func.func @transform_6(%arg0: i32) -> (i32, i32, i32) {
    %c0_i32 = arith.constant 0 : i32
    %c0_i32_0 = arith.constant 0 : i32
    %c0_i32_1 = arith.constant 0 : i32
    return %arg0, %c0_i32, %c0_i32_0 : i32, i32, i32
  }
}

</mosaic_0001>

<llo_original>
// kernel: tpu_custom_call.1
$region0: #{tpu_custom_call.1}
  #allocation0 [shape = 'u32[]', space=smem, size = 0x4, offset = 0x4, fixed_abs, tag = 'smem constant byte address 0x4 - core index']
  #allocation1 [shape = 'u32[144,128]{1,0:T(1,128)}', space=vmem, size = 0x12000, scoped, tag = 'internal scratch']
  %s0 = inlined_call_operand.vmem [shape: f32[2,8,291], index: 0, kind: input, shape index: {}]
  %s1 = inlined_call_operand.hbm [shape: f32[1,291], index: 1, kind: input, shape index: {}]
  %s2 = inlined_call_operand.vmem [shape: f32[16,8], index: 2, kind: input, shape index: {}]
  %s3 = inlined_call_operand.vmem [shape: f32[16,3], index: 3, kind: input, shape index: {}]
  %s4 = inlined_call_operand.vmem [shape: f32[16,96], index: 4, kind: input, shape index: {}]
  %s5 = inlined_call_operand.vmem [shape: f32[16,1], index: 5, kind: input, shape index: {}]
  %s6 = inlined_call_operand.hbm [shape: f32[2,16,272], index: 6, kind: output, shape index: {}]
  %s7 = sld [smem:[#allocation0]]
  $region61: #{tpu_custom_call.1} parent=0
    _
  %s9 = ssub.s32 1, %s7
  %s10 = scalar_select 0, %s9, %s7
  $region1: #{tpu_custom_call.1} parent=0
    #allocation2 [shape = 'u8[1536]{0}', space=vmem, size = 0x800, scoped, tag = 'input window, operand 1, single buffered']
    #allocation3 [shape = 's32[2]{0}', space=sflag, size = 0x8, scoped, tag = 'scoped memory for tpu_custom_call.1']
    #allocation4 [shape = 's32[2]{0}', space=sflag, size = 0x8, scoped, tag = 'scoped memory for tpu_custom_call.1']
    #allocation5 [shape = 'u8[49152]{0}', space=vmem, size = 0xc000, scoped, tag = 'output window, operand 0']
    %11 = vsyncpa [#allocation3], 0
    %12 = vsyncpa [#allocation4], 0
    %s13 = scalar_lea.sflag [#allocation4], 1
    %14 = vsyncpa %s13, 0
    loop: start=0, step=1, limit=4
    $region2: #{tpu_custom_call.1} parent=1 // loop_pre_header
      _
    $region3: #{tpu_custom_call.1} parent=1 // loop_header
      %s16 = sphi 0, %s20
      %p17 = scmp.ge.s32.totalorder %s16, 4
      %s26 = sphi 0, %s28
      %s29 = sphi 0, %s26
      %s30 = sphi 0, %s29
      %s46 = sphi 0, %s30
      %s50 = sphi 0, %s50
      %s52 = sphi 0, %s50
      %s53 = sphi 0, %s52
      %s67 = sphi 0, %s53
      %s71 = sphi 0, %s71
      %s73 = sphi 0, %s71
      %s74 = sphi 0, %s73
      %s88 = sphi 0, %s74
      %s92 = sphi 0, %s92
      %s94 = sphi 0, %s92
      %s95 = sphi 0, %s94
      %s109 = sphi 0, %s95
      %s113 = sphi 0, %s113
      %s115 = sphi 0, %s113
      %s116 = sphi 0, %s115
      %s130 = sphi 0, %s116
      %s134 = sphi 0, %s134
      %s136 = sphi 0, %s134
      %s137 = sphi 0, %s136
      %s151 = sphi 0, %s137
      %s157 = sphi 0, %s159
      %s160 = sphi 0, %s157
      %s161 = sphi 0, %s160
      %s177 = sphi 0, %s161
    $region4: #{tpu_custom_call.1} parent=1 // loop_header_branch
      %19 = sbr.rel (%p17) target = $region8
    $region5: #{tpu_custom_call.1} parent=1 // loop_body
      %s21 = ssub.s32 %s16, 1
      %s22 = ssub.s32 %s16, 2
      %s23 = sadd.s32 %s16, 1
      %s24 = ssub.s32 %s16, %s23
      %p25 = scmp.eq.s32.totalorder %s24, 0
      %s27 = sadd.s32 %s26, 1
      %s28 = scalar_select %p25, %s26, %s27
      %p31 = pneg %p25
      %p32 = scmp.eq.s32.totalorder %s16, 1
      %p33 = por %p31, %p32
      %p34 = scmp.ne.s32.totalorder %s26, %s29
      %p35 = scmp.eq.s32.totalorder %s16, 0
      %p36 = por %p34, %p35
      %p37 = scmp.ne.s32.totalorder %s26, %s29
      %p38 = scmp.eq.s32.totalorder %s21, 1
      %p39 = por %p37, %p38
      %p40 = scmp.ne.s32.totalorder %s29, %s30
      %p41 = scmp.eq.s32.totalorder %s21, 0
      %p42 = por %p40, %p41
      %p43 = scmp.ne.s32.totalorder %s29, %s30
      %p44 = scmp.eq.s32.totalorder %s22, 1
      %p45 = por %p43, %p44
      %p47 = scmp.ne.s32.totalorder %s30, %s46
      %p48 = scmp.eq.s32.totalorder %s22, 0
      %p49 = por %p47, %p48
      %s51 = sadd.s32 %s50, 1
      %p54 = scmp.eq.s32.totalorder %s16, 1
      %p55 = scmp.ne.s32.totalorder %s50, %s52
      %p56 = scmp.eq.s32.totalorder %s16, 0
      %p57 = por %p55, %p56
      %p58 = scmp.ne.s32.totalorder %s50, %s52
      %p59 = scmp.eq.s32.totalorder %s21, 1
      %p60 = por %p58, %p59
      %p61 = scmp.ne.s32.totalorder %s52, %s53
      %p62 = scmp.eq.s32.totalorder %s21, 0
      %p63 = por %p61, %p62
      %p64 = scmp.ne.s32.totalorder %s52, %s53
      %p65 = scmp.eq.s32.totalorder %s22, 1
      %p66 = por %p64, %p65
      %p68 = scmp.ne.s32.totalorder %s53, %s67
      %p69 = scmp.eq.s32.totalorder %s22, 0
      %p70 = por %p68, %p69
      %s72 = sadd.s32 %s71, 1
      %p75 = scmp.eq.s32.totalorder %s16, 1
      %p76 = scmp.ne.s32.totalorder %s71, %s73
      %p77 = scmp.eq.s32.totalorder %s16, 0
      %p78 = por %p76, %p77
      %p79 = scmp.ne.s32.totalorder %s71, %s73
      %p80 = scmp.eq.s32.totalorder %s21, 1
      %p81 = por %p79, %p80
      %p82 = scmp.ne.s32.totalorder %s73, %s74
      %p83 = scmp.eq.s32.totalorder %s21, 0
      %p84 = por %p82, %p83
      %p85 = scmp.ne.s32.totalorder %s73, %s74
      %p86 = scmp.eq.s32.totalorder %s22, 1
      %p87 = por %p85, %p86
      %p89 = scmp.ne.s32.totalorder %s74, %s88
      %p90 = scmp.eq.s32.totalorder %s22, 0
      %p91 = por %p89, %p90
      %s93 = sadd.s32 %s92, 1
      %p96 = scmp.eq.s32.totalorder %s16, 1
      %p97 = scmp.ne.s32.totalorder %s92, %s94
      %p98 = scmp.eq.s32.totalorder %s16, 0
      %p99 = por %p97, %p98
      %p100 = scmp.ne.s32.totalorder %s92, %s94
      %p101 = scmp.eq.s32.totalorder %s21, 1
      %p102 = por %p100, %p101
      %p103 = scmp.ne.s32.totalorder %s94, %s95
      %p104 = scmp.eq.s32.totalorder %s21, 0
      %p105 = por %p103, %p104
      %p106 = scmp.ne.s32.totalorder %s94, %s95
      %p107 = scmp.eq.s32.totalorder %s22, 1
      %p108 = por %p106, %p107
      %p110 = scmp.ne.s32.totalorder %s95, %s109
      %p111 = scmp.eq.s32.totalorder %s22, 0
      %p112 = por %p110, %p111
      %s114 = sadd.s32 %s113, 1
      %p117 = scmp.eq.s32.totalorder %s16, 1
      %p118 = scmp.ne.s32.totalorder %s113, %s115
      %p119 = scmp.eq.s32.totalorder %s16, 0
      %p120 = por %p118, %p119
      %p121 = scmp.ne.s32.totalorder %s113, %s115
      %p122 = scmp.eq.s32.totalorder %s21, 1
      %p123 = por %p121, %p122
      %p124 = scmp.ne.s32.totalorder %s115, %s116
      %p125 = scmp.eq.s32.totalorder %s21, 0
      %p126 = por %p124, %p125
      %p127 = scmp.ne.s32.totalorder %s115, %s116
      %p128 = scmp.eq.s32.totalorder %s22, 1
      %p129 = por %p127, %p128
      %p131 = scmp.ne.s32.totalorder %s116, %s130
      %p132 = scmp.eq.s32.totalorder %s22, 0
      %p133 = por %p131, %p132
      %s135 = sadd.s32 %s134, 1
      %p138 = scmp.eq.s32.totalorder %s16, 1
      %p139 = scmp.ne.s32.totalorder %s134, %s136
      %p140 = scmp.eq.s32.totalorder %s16, 0
      %p141 = por %p139, %p140
      %p142 = scmp.ne.s32.totalorder %s134, %s136
      %p143 = scmp.eq.s32.totalorder %s21, 1
      %p144 = por %p142, %p143
      %p145 = scmp.ne.s32.totalorder %s136, %s137
      %p146 = scmp.eq.s32.totalorder %s21, 0
      %p147 = por %p145, %p146
      %p148 = scmp.ne.s32.totalorder %s136, %s137
      %p149 = scmp.eq.s32.totalorder %s22, 1
      %p150 = por %p148, %p149
      %p152 = scmp.ne.s32.totalorder %s137, %s151
      %p153 = scmp.eq.s32.totalorder %s22, 0
      %p154 = por %p152, %p153
      %s155 = ssub.s32 %s16, %s23
      %p156 = scmp.eq.s32.totalorder %s155, 0
      %s158 = sadd.s32 %s157, 1
      %s159 = scalar_select %p156, %s157, %s158
      %p162 = pneg %p156
      %p163 = scmp.eq.s32.totalorder %s16, 1
      %p164 = por %p162, %p163
      %p165 = scmp.ne.s32.totalorder %s157, %s160
      %p166 = scmp.eq.s32.totalorder %s16, 0
      %p167 = por %p165, %p166
      %p168 = scmp.ne.s32.totalorder %s157, %s160
      %p169 = scmp.eq.s32.totalorder %s21, 1
      %p170 = por %p168, %p169
      %p171 = scmp.ne.s32.totalorder %s160, %s161
      %p172 = scmp.eq.s32.totalorder %s21, 0
      %p173 = por %p171, %p172
      %p174 = scmp.ne.s32.totalorder %s160, %s161
      %p175 = scmp.eq.s32.totalorder %s22, 1
      %p176 = por %p174, %p175
      %p178 = scmp.ne.s32.totalorder %s161, %s177
      %p179 = scmp.eq.s32.totalorder %s22, 0
      %p180 = por %p178, %p179
      %p181 = scmp.le.s32.totalorder 1, %s16
      %p182 = scmp.lt.s32.totalorder %s16, 3
      %p183 = pnand %p181, %p182
      %p184 = pneg %p183
      // Predicated region
      $region9: #{tpu_custom_call.1} parent=5 // pred_check
        _
      $region10: #{tpu_custom_call.1} parent=5 // pred_check_branch
        %186 = sbr.rel (%p183) target = $region12
      $region11: #{tpu_custom_call.1} parent=5 // pred_region
        %s187 = ssub.s32 %s16, 1
        // Predicated region
        $region13: #{tpu_custom_call.1} parent=11 // pred_check
          %p188 = pneg %p63
        $region14: #{tpu_custom_call.1} parent=11 // pred_check_branch
          %190 = sbr.rel (%p188) target = $region16
        $region15: #{tpu_custom_call.1} parent=11 // pred_region
          %s192 = ssub.s32 48, 48
          %193 = vsyncadd [#allocation3], %s192
          %s195 = sshll.u32 [#allocation2], 4
          %s196 = int_to_ptr.vmem [resolvable:$true] %s195
          %198 = dma.hbm_to_vmem [thread:$0]  %s1, 48, %s196, [#allocation3]
        $region16: #{tpu_custom_call.1} parent=11 // pred_fallthru
          _
        // Predicated region
        $region17: #{tpu_custom_call.1} parent=11 // pred_check
          %p199 = pneg %p84
        $region18: #{tpu_custom_call.1} parent=11 // pred_check_branch
          %201 = sbr.rel (%p199) target = $region20
        $region19: #{tpu_custom_call.1} parent=11 // pred_region
          _
        $region20: #{tpu_custom_call.1} parent=11 // pred_fallthru
          _
        // Predicated region
        $region21: #{tpu_custom_call.1} parent=11 // pred_check
          %p202 = pneg %p105
        $region22: #{tpu_custom_call.1} parent=11 // pred_check_branch
          %204 = sbr.rel (%p202) target = $region24
        $region23: #{tpu_custom_call.1} parent=11 // pred_region
          _
        $region24: #{tpu_custom_call.1} parent=11 // pred_fallthru
          _
        // Predicated region
        $region25: #{tpu_custom_call.1} parent=11 // pred_check
          %p205 = pneg %p126
        $region26: #{tpu_custom_call.1} parent=11 // pred_check_branch
          %207 = sbr.rel (%p205) target = $region28
        $region27: #{tpu_custom_call.1} parent=11 // pred_region
          _
        $region28: #{tpu_custom_call.1} parent=11 // pred_fallthru
          _
        // Predicated region
        $region29: #{tpu_custom_call.1} parent=11 // pred_check
          %p208 = pneg %p147
        $region30: #{tpu_custom_call.1} parent=11 // pred_check_branch
          %210 = sbr.rel (%p208) target = $region32
        $region31: #{tpu_custom_call.1} parent=11 // pred_region
          _
        $region32: #{tpu_custom_call.1} parent=11 // pred_fallthru
          _
      $region12: #{tpu_custom_call.1} parent=5 // pred_fallthru
        _
      %p211 = scmp.lt.s32.totalorder %s16, 2
      // Predicated region
      $region33: #{tpu_custom_call.1} parent=5 // pred_check
        %p212 = pneg %p211
      $region34: #{tpu_custom_call.1} parent=5 // pred_check_branch
        %214 = sbr.rel (%p212) target = $region36
      $region35: #{tpu_custom_call.1} parent=5 // pred_region
        // Predicated region
        $region37: #{tpu_custom_call.1} parent=35 // pred_check
          %p215 = pneg %p36
        $region38: #{tpu_custom_call.1} parent=35 // pred_check_branch
          %217 = sbr.rel (%p215) target = $region40
        $region39: #{tpu_custom_call.1} parent=35 // pred_region
          %p218 = scmp.lt.s32.totalorder %s16, 1
          %s219 = scalar_select %p218, %s16, 1
          %s220 = smul.addr %s219, 3
          %s221 = smul.addr %s220, 8
          %s222 = scalar_lea.vmem %s0, %s221
        $region40: #{tpu_custom_call.1} parent=35 // pred_fallthru
          _
      $region36: #{tpu_custom_call.1} parent=5 // pred_fallthru
        _
      %p223 = scmp.le.s32.totalorder 1, %s16
      %p224 = scmp.lt.s32.totalorder %s16, 3
      %p225 = pnand %p223, %p224
      %p226 = pneg %p225
      // Predicated region
      $region41: #{tpu_custom_call.1} parent=5 // pred_check
        _
      $region42: #{tpu_custom_call.1} parent=5 // pred_check_branch
        %228 = sbr.rel (%p225) target = $region44
      $region43: #{tpu_custom_call.1} parent=5 // pred_region
        %s229 = ssub.s32 %s16, 1
        // Predicated region
        $region45: #{tpu_custom_call.1} parent=43 // pred_check
          %p230 = pneg %p63
        $region46: #{tpu_custom_call.1} parent=43 // pred_check_branch
          %232 = sbr.rel (%p230) target = $region48
        $region47: #{tpu_custom_call.1} parent=43 // pred_region
          %233 = dma.done [#allocation3], 48
        $region48: #{tpu_custom_call.1} parent=43 // pred_fallthru
          _
        %p234 = scmp.lt.s32.totalorder %s21, 1
        %s235 = scalar_select %p234, %s21, 1
        %s236 = smul.addr %s235, 3
        %s237 = smul.addr %s236, 8
        %s238 = scalar_lea.vmem %s0, %s237
        %p239 = pneg %p42
        %p240 = pneg %p39
        %p241 = pneg %p63
        %p242 = pneg %p60
        %p243 = pneg %p84
        %p244 = pneg %p81
        %p245 = pneg %p105
        %p246 = pneg %p102
        %p247 = pneg %p126
        %p248 = pneg %p123
        %p249 = pneg %p147
        %p250 = pneg %p144
        %p251 = pneg %p173
        %p252 = pneg %p170
        %s253 = sand.u32 %s160, 1
        %s254 = scalar_lea.sflag [#allocation4], %s253
        %s255 = sand.u32 %s160, 1
        %s256 = smul.addr %s255, 48
        %s257 = scalar_lea.vmem [#allocation5], %s256
        %p258 = scmp.lt.s32.totalorder %s21, 1
        %s259 = scalar_select %p258, %s21, 1
        %s260 = smul.addr %s259, 3
        %s261 = smul.addr %s260, 8
        %s262 = scalar_lea.vmem %s0, %s261
        %v263 = vld [vmem:[%s262] sm:$0xff]
        %v264 = vld [vmem:[%s262 + $0x8] sm:$0xff]
        %v265 = vld [vmem:[%s262 + $0x10] sm:$0xff]
        %v266 = vld [vmem:[#allocation2] sm:$0x7]
        %v267 = vld [vmem:[%s3] sm:$0xff]
        %v268 = vld [vmem:[%s3 + $0x8] sm:$0xff]
        %v269 = vld [vmem:[%s2] sm:$0xff]
        %v270 = vld [vmem:[%s2 + $0x8] sm:$0xff]
        %272 = vset.pattern.permute.xlu0 0
        %273 = vperm.xlu0 %272, %v267
        %v274 = vpop.permute.xlu0 %273
        %277 = vset.pattern.permute.xlu0 0
        %278 = vperm.xlu0 %277, %v268
        %v279 = vpop.permute.xlu0 %278
        %vm281 = vcmask 64512
        %v283 = vsel %vm281, %v269, 0
        %v286 = vsel %vm281, %v270, 0
        %288 = vmatprep.subr.mxu0 %v264
        %289 = vmatpush1.msra.mxu0 %v263
        %290 = vmatprep.subr.mxu0 0.0
        %291 = vmatpush1.msra.mxu0 0.0
        %292 = vmatprep.subr.mxu0 0.0
        %293 = vmatpush1.msra.mxu0 0.0
        %294 = vmatprep.subr.mxu0 0.0
        %295 = vmatpush1.msra.mxu0 0.0
        %296 = vmatprep.subr.mxu0 0.0
        %297 = vmatpush1.msra.mxu0 0.0
        %298 = vmatprep.subr.mxu0 0.0
        %299 = vmatpush1.msra.mxu0 0.0
        %300 = vmatprep.subr.mxu0 0.0
        %301 = vmatpush1.msra.mxu0 0.0
        %302 = vmatprep.subr.mxu0 0.0
        %303 = vmatpush1.msra.mxu0 0.0
        %304 = vmatprep.subr.mxu0 0.0
        %305 = vmatpush1.msra.mxu0 0.0
        %306 = vmatprep.subr.mxu0 0.0
        %307 = vmatpush1.msra.mxu0 0.0
        %308 = vmatprep.subr.mxu0 0.0
        %309 = vmatpush1.msra.mxu0 0.0
        %310 = vmatprep.subr.mxu0 0.0
        %311 = vmatpush1.msra.mxu0 0.0
        %312 = vmatprep.subr.mxu0 0.0
        %313 = vmatpush1.msra.mxu0 0.0
        %314 = vmatprep.subr.mxu0 0.0
        %315 = vmatpush1.msra.mxu0 0.0
        %316 = vmatprep.subr.mxu0 0.0
        %317 = vmatpush1.msra.mxu0 0.0
        %318 = vmatprep.subr.mxu0 0.0
        %319 = vmatpush1.msra.mxu0 0.0
        %320 = vmatprep.subr.mxu0 0.0
        %321 = vmatpush1.msra.mxu0 0.0
        %322 = vmatprep.subr.mxu0 0.0
        %323 = vmatpush1.msra.mxu0 0.0
        %324 = vmatprep.subr.mxu0 0.0
        %325 = vmatpush1.msra.mxu0 0.0
        %326 = vmatprep.subr.mxu0 0.0
        %327 = vmatpush1.msra.mxu0 0.0
        %328 = vmatprep.subr.mxu0 0.0
        %329 = vmatpush1.msra.mxu0 0.0
        %330 = vmatprep.subr.mxu0 0.0
        %331 = vmatpush1.msra.mxu0 0.0
        %332 = vmatprep.subr.mxu0 0.0
        %333 = vmatpush1.msra.mxu0 0.0
        %334 = vmatprep.subr.mxu0 0.0
        %335 = vmatpush1.msra.mxu0 0.0
        %336 = vmatprep.subr.mxu0 0.0
        %337 = vmatpush1.msra.mxu0 0.0
        %338 = vmatprep.subr.mxu0 0.0
        %339 = vmatpush1.msra.mxu0 0.0
        %340 = vmatprep.subr.mxu0 0.0
        %341 = vmatpush1.msra.mxu0 0.0
        %342 = vmatprep.subr.mxu0 0.0
        %343 = vmatpush1.msra.mxu0 0.0
        %344 = vmatprep.subr.mxu0 0.0
        %345 = vmatpush1.msra.mxu0 0.0
        %346 = vmatprep.subr.mxu0 0.0
        %347 = vmatpush1.msra.mxu0 0.0
        %348 = vmatprep.subr.mxu0 0.0
        %349 = vmatpush1.msra.mxu0 0.0
        %350 = vmatprep.subr.mxu0 0.0
        %351 = vmatpush1.msra.mxu0 0.0
        %352 = vmatprep.mubr.f32.mxu0 0.0
        %353 = vmatmul.mubr.f32.gmra.mrb[0].mxu0 %v283
        %v354 = vpop.f32.mrb[0].mxu0
        %v355 = vadd.f32 %v274, %v354
        %v356 = vpop.f32.mrb[0].mxu0
        %v357 = vadd.f32 %v274, %v356
        %358 = vmatprep.mubr.f32.mxu0 0.0
        %359 = vmatmul.mubr.f32.gmra.mrb[0].mxu0 %v286
        %v360 = vpop.f32.mrb[0].mxu0
        %v361 = vadd.f32 %v279, %v360
        %v362 = vpop.f32.mrb[0].mxu0
        %v363 = vadd.f32 %v279, %v362
        %364 = vdwg.mxu0
        %365 = vmatprep.subr.mxu0 0.0
        %366 = vmatpush1.msra.mxu0 %v265
        %367 = vmatprep.subr.mxu0 0.0
        %368 = vmatpush1.msra.mxu0 0.0
        %369 = vmatprep.subr.mxu0 0.0
        %370 = vmatpush1.msra.mxu0 0.0
        %371 = vmatprep.subr.mxu0 0.0
        %372 = vmatpush1.msra.mxu0 0.0
        %373 = vmatprep.subr.mxu0 0.0
        %374 = vmatpush1.msra.mxu0 0.0
        %375 = vmatprep.subr.mxu0 0.0
        %376 = vmatpush1.msra.mxu0 0.0
        %377 = vmatprep.subr.mxu0 0.0
        %378 = vmatpush1.msra.mxu0 0.0
        %379 = vmatprep.subr.mxu0 0.0
        %380 = vmatpush1.msra.mxu0 0.0
        %381 = vmatprep.subr.mxu0 0.0
        %382 = vmatpush1.msra.mxu0 0.0
        %383 = vmatprep.subr.mxu0 0.0
        %384 = vmatpush1.msra.mxu0 0.0
        %385 = vmatprep.subr.mxu0 0.0
        %386 = vmatpush1.msra.mxu0 0.0
        %387 = vmatprep.subr.mxu0 0.0
        %388 = vmatpush1.msra.mxu0 0.0
        %389 = vmatprep.subr.mxu0 0.0
        %390 = vmatpush1.msra.mxu0 0.0
        %391 = vmatprep.subr.mxu0 0.0
        %392 = vmatpush1.msra.mxu0 0.0
        %393 = vmatprep.subr.mxu0 0.0
        %394 = vmatpush1.msra.mxu0 0.0
        %395 = vmatprep.subr.mxu0 0.0
        %396 = vmatpush1.msra.mxu0 0.0
        %397 = vmatprep.subr.mxu0 0.0
        %398 = vmatpush1.msra.mxu0 0.0
        %399 = vmatprep.subr.mxu0 0.0
        %400 = vmatpush1.msra.mxu0 0.0
        %401 = vmatprep.subr.mxu0 0.0
        %402 = vmatpush1.msra.mxu0 0.0
        %403 = vmatprep.subr.mxu0 0.0
        %404 = vmatpush1.msra.mxu0 0.0
        %405 = vmatprep.subr.mxu0 0.0
        %406 = vmatpush1.msra.mxu0 0.0
        %407 = vmatprep.subr.mxu0 0.0
        %408 = vmatpush1.msra.mxu0 0.0
        %409 = vmatprep.subr.mxu0 0.0
        %410 = vmatpush1.msra.mxu0 0.0
        %411 = vmatprep.subr.mxu0 0.0
        %412 = vmatpush1.msra.mxu0 0.0
        %413 = vmatprep.subr.mxu0 0.0
        %414 = vmatpush1.msra.mxu0 0.0
        %415 = vmatprep.subr.mxu0 0.0
        %416 = vmatpush1.msra.mxu0 0.0
        %417 = vmatprep.subr.mxu0 0.0
        %418 = vmatpush1.msra.mxu0 0.0
        %419 = vmatprep.subr.mxu0 0.0
        %420 = vmatpush1.msra.mxu0 0.0
        %421 = vmatprep.subr.mxu0 0.0
        %422 = vmatpush1.msra.mxu0 0.0
        %423 = vmatprep.subr.mxu0 0.0
        %424 = vmatpush1.msra.mxu0 0.0
        %425 = vmatprep.subr.mxu0 0.0
        %426 = vmatpush1.msra.mxu0 0.0
        %427 = vmatprep.subr.mxu0 0.0
        %428 = vmatpush1.msra.mxu0 0.0
        %429 = vmatprep.mubr.f32.mxu0 0.0
        %430 = vmatmul.mubr.f32.gmra.mrb[0].mxu0 %v283
        %v431 = vpop.f32.mrb[0].mxu0
        %v432 = vadd.f32 %v274, %v431
        %v433 = vpop.f32.mrb[0].mxu0
        %434 = vmatprep.mubr.f32.mxu0 0.0
        %435 = vmatmul.mubr.f32.gmra.mrb[0].mxu0 %v286
        %v436 = vpop.f32.mrb[0].mxu0
        %v437 = vadd.f32 %v279, %v436
        %v438 = vpop.f32.mrb[0].mxu0
        %439 = vdwg.mxu0
        %v441 = vlaneseq
        %v442 = vshrl.u32 %v441, 7
        %v443 = vsub.s32 0, %v442
        %v444 = vrot.slane %v266, %v443
        %v445 = vlaneseq
        %v446 = vshrl.u32 %v445, 7
        %v447 = vsub.s32 1, %v446
        %v448 = vrot.slane %v266, %v447
        %v449 = vlaneseq
        %v450 = vshrl.u32 %v449, 7
        %v451 = vsub.s32 2, %v450
        %v452 = vrot.slane %v266, %v451
        %v456 = vmul.f32 %v355, %v444
        %v457 = vmul.f32 %v357, %v448
        %v458 = vmul.f32 %v432, %v452
        %v459 = vmul.f32 %v361, %v444
        %v460 = vmul.f32 %v363, %v448
        %v461 = vmul.f32 %v437, %v452
        %v462 = vadd.f32 %v456, %v457
        %vm463 = vcmask 285696
        %v464 = vsel %vm463, %v458, 0.0
        %v465 = vadd.f32 %v462, %v464
        %v466 = vadd.f32 %v465, %v459
        %v467 = vadd.f32 %v466, %v460
        %v468 = vsel %vm463, %v461, 0.0
        %v469 = vadd.f32 %v467, %v468
        %470 = vadd.xlane.f32.xlu0 %v469
        %v471 = vpop.xlane.xlu0 %470
        %v472 = vrot.slane %v471, 4
        %v473 = vadd.f32 %v471, %v472
        %v474 = vrot.slane %v473, 2
        %v475 = vadd.f32 %v473, %v474
        %v476 = vrot.slane %v475, 1
        %v477 = vadd.f32 %v475, %v476
        %s478 = vtos %v477
        %v479 = vmul.f32 %v456, %v456
        %v480 = vmul.f32 %v457, %v457
        %v481 = vmul.f32 %v458, %v458
        %v482 = vmul.f32 %v459, %v459
        %v483 = vmul.f32 %v460, %v460
        %v484 = vmul.f32 %v461, %v461
        %v485 = vadd.f32 %v479, %v480
        %v486 = vsel %vm463, %v481, 0.0
        %v487 = vadd.f32 %v485, %v486
        %v488 = vadd.f32 %v487, %v482
        %v489 = vadd.f32 %v488, %v483
        %v490 = vsel %vm463, %v484, 0.0
        %v491 = vadd.f32 %v489, %v490
        %492 = vadd.xlane.f32.xlu0 %v491
        %v493 = vpop.xlane.xlu0 %492
        %v494 = vrot.slane %v493, 4
        %v495 = vadd.f32 %v493, %v494
        %v496 = vrot.slane %v495, 2
        %v497 = vadd.f32 %v495, %v496
        %v498 = vrot.slane %v497, 1
        %v499 = vadd.f32 %v497, %v498
        %s500 = vtos %v499
        %v501 = vrcp.pop 4096.0
        %s502 = vtos %v501
        %s503 = smul.f32 %s478, %s502
        %v504 = vrcp.pop 4096.0
        %s505 = vtos %v504
        %s506 = smul.f32 %s500, %s505
        %s507 = smul.f32 %s503, %s503
        %s508 = ssub.f32 %s506, %s507
        %s509 = sadd.f32 %s508, 1e-05
        %v510 = vstv %s509
        %v511 = vrsqrt.pop %v510
        %s512 = vtos %v511
        %v513 = vstv %s512
        %v514 = vmul.f32 %v267, %v513
        %v515 = vmul.f32 %v268, %v513
        %v516 = vstv %s503
        %v517 = vmul.f32 %v516, %v514
        %v518 = vmul.f32 %v516, %v515
        %521 = vrot.lane.b32.xlu0 %v517, 1
        %v522 = vpop.permute.xlu0 %521
        %523 = vrot.lane.b32.xlu0 %v518, 1
        %v524 = vpop.permute.xlu0 %523
        %v527 = vsub.f32 %v267, %v522
        %v528 = vsub.f32 %v268, %v524
        %530 = vset.pattern.permute.xlu0 1
        %531 = vperm.xlu0 %530, %v514
        %v532 = vpop.permute.xlu0 %531
        %535 = vset.pattern.permute.xlu0 1
        %536 = vperm.xlu0 %535, %v515
        %v537 = vpop.permute.xlu0 %536
        %v539 = vmul.f32 %v456, %v532
        %v540 = vmul.f32 %v457, %v532
        %v541 = vmul.f32 %v458, %v532
        %v542 = vmul.f32 %v459, %v537
        %v543 = vmul.f32 %v460, %v537
        %v544 = vmul.f32 %v461, %v537
        %546 = vset.pattern.permute.xlu0 2
        %547 = vperm.xlu0 %546, %v527
        %v548 = vpop.permute.xlu0 %547
        %551 = vset.pattern.permute.xlu0 2
        %552 = vperm.xlu0 %551, %v528
        %v553 = vpop.permute.xlu0 %552
        %v555 = vadd.f32 %v539, %v548
        %v556 = vadd.f32 %v540, %v548
        %v557 = vadd.f32 %v541, %v548
        %v558 = vadd.f32 %v542, %v553
        %v559 = vadd.f32 %v543, %v553
        %v560 = vadd.f32 %v544, %v553
        %v561 = vmul.f32 %v555, %v444
        %v562 = vmul.f32 %v556, %v448
        %v563 = vmul.f32 %v557, %v452
        %v564 = vmul.f32 %v558, %v444
        %v565 = vmul.f32 %v559, %v448
        %v566 = vmul.f32 %v560, %v452
        %573 = vrot.lane.b32.xlu0 %v561, 127
        %v574 = vpop.permute.xlu0 %573
        %575 = vrot.lane.b32.xlu0 %v562, 127
        %v576 = vpop.permute.xlu0 %575
        %577 = vrot.lane.b32.xlu0 %v563, 127
        %v578 = vpop.permute.xlu0 %577
        %579 = vrot.lane.b32.xlu0 %v564, 127
        %v580 = vpop.permute.xlu0 %579
        %581 = vrot.lane.b32.xlu0 %v565, 127
        %v582 = vpop.permute.xlu0 %581
        %583 = vrot.lane.b32.xlu0 %v566, 127
        %v584 = vpop.permute.xlu0 %583
        %vm585 = vcmask 1039360
        %v586 = vsel %vm585, %v574, %v576
        %v587 = vsel %vm585, %v576, %v578
        %v588 = vsel %vm585, %v580, %v582
        %v589 = vsel %vm585, %v582, %v584
        %596 = vrot.lane.b32.xlu0 %v561, 126
        %v597 = vpop.permute.xlu0 %596
        %598 = vrot.lane.b32.xlu0 %v562, 126
        %v599 = vpop.permute.xlu0 %598
        %600 = vrot.lane.b32.xlu0 %v563, 126
        %v601 = vpop.permute.xlu0 %600
        %602 = vrot.lane.b32.xlu0 %v564, 126
        %v603 = vpop.permute.xlu0 %602
        %604 = vrot.lane.b32.xlu0 %v565, 126
        %v605 = vpop.permute.xlu0 %604
        %606 = vrot.lane.b32.xlu0 %v566, 126
        %v607 = vpop.permute.xlu0 %606
        %vm608 = vcmask 1031168
        %v609 = vsel %vm608, %v597, %v599
        %v610 = vsel %vm608, %v599, %v601
        %v611 = vsel %vm608, %v603, %v605
        %v612 = vsel %vm608, %v605, %v607
        %619 = vrot.lane.b32.xlu0 %v561, 111
        %v620 = vpop.permute.xlu0 %619
        %621 = vrot.lane.b32.xlu0 %v562, 111
        %v622 = vpop.permute.xlu0 %621
        %623 = vrot.lane.b32.xlu0 %v563, 111
        %v624 = vpop.permute.xlu0 %623
        %625 = vrot.lane.b32.xlu0 %v564, 111
        %v626 = vpop.permute.xlu0 %625
        %627 = vrot.lane.b32.xlu0 %v565, 111
        %v628 = vpop.permute.xlu0 %627
        %629 = vrot.lane.b32.xlu0 %v566, 111
        %v630 = vpop.permute.xlu0 %629
        %vm631 = vcmask 908288
        %v632 = vsel %vm631, %v620, %v622
        %v633 = vsel %vm631, %v622, %v624
        %v634 = vsel %vm631, %v626, %v628
        %v635 = vsel %vm631, %v628, %v630
        %642 = vrot.lane.b32.xlu0 %v561, 110
        %v643 = vpop.permute.xlu0 %642
        %644 = vrot.lane.b32.xlu0 %v562, 110
        %v645 = vpop.permute.xlu0 %644
        %646 = vrot.lane.b32.xlu0 %v563, 110
        %v647 = vpop.permute.xlu0 %646
        %648 = vrot.lane.b32.xlu0 %v564, 110
        %v649 = vpop.permute.xlu0 %648
        %650 = vrot.lane.b32.xlu0 %v565, 110
        %v651 = vpop.permute.xlu0 %650
        %652 = vrot.lane.b32.xlu0 %v566, 110
        %v653 = vpop.permute.xlu0 %652
        %vm654 = vcmask 900096
        %v655 = vsel %vm654, %v643, %v645
        %v656 = vsel %vm654, %v645, %v647
        %v657 = vsel %vm654, %v649, %v651
        %v658 = vsel %vm654, %v651, %v653
        %665 = vrot.lane.b32.xlu0 %v561, 109
        %v666 = vpop.permute.xlu0 %665
        %667 = vrot.lane.b32.xlu0 %v562, 109
        %v668 = vpop.permute.xlu0 %667
        %669 = vrot.lane.b32.xlu0 %v563, 109
        %v670 = vpop.permute.xlu0 %669
        %671 = vrot.lane.b32.xlu0 %v564, 109
        %v672 = vpop.permute.xlu0 %671
        %673 = vrot.lane.b32.xlu0 %v565, 109
        %v674 = vpop.permute.xlu0 %673
        %675 = vrot.lane.b32.xlu0 %v566, 109
        %v676 = vpop.permute.xlu0 %675
        %vm677 = vcmask 891904
        %v678 = vsel %vm677, %v666, %v668
        %v679 = vsel %vm677, %v668, %v670
        %v680 = vsel %vm677, %v672, %v674
        %v681 = vsel %vm677, %v674, %v676
        %v688 = vld [vmem:[%s4] sm:$0xff]
        %v689 = vld [vmem:[%s4 + $0x8] sm:$0xff]
        %v690 = vld [vmem:[%s5] sm:$0xff]
        %v691 = vld [vmem:[%s5 + $0x8] sm:$0xff]
        %693 = vset.pattern.permute.xlu0 0
        %694 = vperm.xlu0 %693, %v690
        %v695 = vpop.permute.xlu0 %694
        %698 = vset.pattern.permute.xlu0 0
        %699 = vperm.xlu0 %698, %v691
        %v700 = vpop.permute.xlu0 %699
        %vm702 = vcmask 785408
        %v704 = vsel %vm702, %v688, 0
        %v707 = vsel %vm702, %v689, 0
        %709 = vmatprep.subr.mxu0 %v562
        %710 = vmatpush1.msra.mxu0 %v561
        %711 = vmatprep.subr.mxu0 %v565
        %712 = vmatpush1.msra.mxu0 %v564
        %713 = vmatprep.subr.mxu0 %v587
        %714 = vmatpush1.msra.mxu0 %v586
        %715 = vmatprep.subr.mxu0 %v589
        %716 = vmatpush1.msra.mxu0 %v588
        %717 = vmatprep.subr.mxu0 %v610
        %718 = vmatpush1.msra.mxu0 %v609
        %719 = vmatprep.subr.mxu0 %v612
        %720 = vmatpush1.msra.mxu0 %v611
        %721 = vmatprep.subr.mxu0 %v633
        %722 = vmatpush1.msra.mxu0 %v632
        %723 = vmatprep.subr.mxu0 %v635
        %724 = vmatpush1.msra.mxu0 %v634
        %725 = vmatprep.subr.mxu0 %v656
        %726 = vmatpush1.msra.mxu0 %v655
        %727 = vmatprep.subr.mxu0 %v658
        %728 = vmatpush1.msra.mxu0 %v657
        %729 = vmatprep.subr.mxu0 %v679
        %730 = vmatpush1.msra.mxu0 %v678
        %731 = vmatprep.subr.mxu0 %v681
        %732 = vmatpush1.msra.mxu0 %v680
        %733 = vmatprep.subr.mxu0 0.0
        %734 = vmatpush1.msra.mxu0 0.0
        %735 = vmatprep.subr.mxu0 0.0
        %736 = vmatpush1.msra.mxu0 0.0
        %737 = vmatprep.subr.mxu0 0.0
        %738 = vmatpush1.msra.mxu0 0.0
        %739 = vmatprep.subr.mxu0 0.0
        %740 = vmatpush1.msra.mxu0 0.0
        %741 = vmatprep.subr.mxu0 0.0
        %742 = vmatpush1.msra.mxu0 0.0
        %743 = vmatprep.subr.mxu0 0.0
        %744 = vmatpush1.msra.mxu0 0.0
        %745 = vmatprep.subr.mxu0 0.0
        %746 = vmatpush1.msra.mxu0 0.0
        %747 = vmatprep.subr.mxu0 0.0
        %748 = vmatpush1.msra.mxu0 0.0
        %749 = vmatprep.subr.mxu0 0.0
        %750 = vmatpush1.msra.mxu0 0.0
        %751 = vmatprep.subr.mxu0 0.0
        %752 = vmatpush1.msra.mxu0 0.0
        %753 = vmatprep.subr.mxu0 0.0
        %754 = vmatpush1.msra.mxu0 0.0
        %755 = vmatprep.subr.mxu0 0.0
        %756 = vmatpush1.msra.mxu0 0.0
        %757 = vmatprep.subr.mxu0 0.0
        %758 = vmatpush1.msra.mxu0 0.0
        %759 = vmatprep.subr.mxu0 0.0
        %760 = vmatpush1.msra.mxu0 0.0
        %761 = vmatprep.subr.mxu0 0.0
        %762 = vmatpush1.msra.mxu0 0.0
        %763 = vmatprep.subr.mxu0 0.0
        %764 = vmatpush1.msra.mxu0 0.0
        %765 = vmatprep.subr.mxu0 0.0
        %766 = vmatpush1.msra.mxu0 0.0
        %767 = vmatprep.subr.mxu0 0.0
        %768 = vmatpush1.msra.mxu0 0.0
        %769 = vmatprep.subr.mxu0 0.0
        %770 = vmatpush1.msra.mxu0 0.0
        %771 = vmatprep.subr.mxu0 0.0
        %772 = vmatpush1.msra.mxu0 0.0
        %773 = vmatprep.mubr.f32.mxu0 0.0
        %774 = vmatmul.mubr.f32.gmra.mrb[0].mxu0 %v704
        %v775 = vpop.f32.mrb[0].mxu0
        %v776 = vadd.f32 %v695, %v775
        %v777 = vpop.f32.mrb[0].mxu0
        %v778 = vadd.f32 %v695, %v777
        %779 = vmatprep.mubr.f32.mxu0 0.0
        %780 = vmatmul.mubr.f32.gmra.mrb[0].mxu0 %v707
        %v781 = vpop.f32.mrb[0].mxu0
        %v782 = vadd.f32 %v700, %v781
        %v783 = vpop.f32.mrb[0].mxu0
        %v784 = vadd.f32 %v700, %v783
        %785 = vdwg.mxu0
        %786 = vmatprep.subr.mxu0 0.0
        %787 = vmatpush1.msra.mxu0 %v563
        %788 = vmatprep.subr.mxu0 0.0
        %789 = vmatpush1.msra.mxu0 %v566
        %790 = vmatprep.subr.mxu0 0.0
        %791 = vmatpush1.msra.mxu0 %v578
        %792 = vmatprep.subr.mxu0 0.0
        %793 = vmatpush1.msra.mxu0 %v584
        %794 = vmatprep.subr.mxu0 0.0
        %795 = vmatpush1.msra.mxu0 %v601
        %796 = vmatprep.subr.mxu0 0.0
        %797 = vmatpush1.msra.mxu0 %v607
        %798 = vmatprep.subr.mxu0 0.0
        %799 = vmatpush1.msra.mxu0 %v624
        %800 = vmatprep.subr.mxu0 0.0
        %801 = vmatpush1.msra.mxu0 %v630
        %802 = vmatprep.subr.mxu0 0.0
        %803 = vmatpush1.msra.mxu0 %v647
        %804 = vmatprep.subr.mxu0 0.0
        %805 = vmatpush1.msra.mxu0 %v653
        %806 = vmatprep.subr.mxu0 0.0
        %807 = vmatpush1.msra.mxu0 %v670
        %808 = vmatprep.subr.mxu0 0.0
        %809 = vmatpush1.msra.mxu0 %v676
        %810 = vmatprep.subr.mxu0 0.0
        %811 = vmatpush1.msra.mxu0 0.0
        %812 = vmatprep.subr.mxu0 0.0
        %813 = vmatpush1.msra.mxu0 0.0
        %814 = vmatprep.subr.mxu0 0.0
        %815 = vmatpush1.msra.mxu0 0.0
        %816 = vmatprep.subr.mxu0 0.0
        %817 = vmatpush1.msra.mxu0 0.0
        %818 = vmatprep.subr.mxu0 0.0
        %819 = vmatpush1.msra.mxu0 0.0
        %820 = vmatprep.subr.mxu0 0.0
        %821 = vmatpush1.msra.mxu0 0.0
        %822 = vmatprep.subr.mxu0 0.0
        %823 = vmatpush1.msra.mxu0 0.0
        %824 = vmatprep.subr.mxu0 0.0
        %825 = vmatpush1.msra.mxu0 0.0
        %826 = vmatprep.subr.mxu0 0.0
        %827 = vmatpush1.msra.mxu0 0.0
        %828 = vmatprep.subr.mxu0 0.0
        %829 = vmatpush1.msra.mxu0 0.0
        %830 = vmatprep.subr.mxu0 0.0
        %831 = vmatpush1.msra.mxu0 0.0
        %832 = vmatprep.subr.mxu0 0.0
        %833 = vmatpush1.msra.mxu0 0.0
        %834 = vmatprep.subr.mxu0 0.0
        %835 = vmatpush1.msra.mxu0 0.0
        %836 = vmatprep.subr.mxu0 0.0
        %837 = vmatpush1.msra.mxu0 0.0
        %838 = vmatprep.subr.mxu0 0.0
        %839 = vmatpush1.msra.mxu0 0.0
        %840 = vmatprep.subr.mxu0 0.0
        %841 = vmatpush1.msra.mxu0 0.0
        %842 = vmatprep.subr.mxu0 0.0
        %843 = vmatpush1.msra.mxu0 0.0
        %844 = vmatprep.subr.mxu0 0.0
        %845 = vmatpush1.msra.mxu0 0.0
        %846 = vmatprep.subr.mxu0 0.0
        %847 = vmatpush1.msra.mxu0 0.0
        %848 = vmatprep.subr.mxu0 0.0
        %849 = vmatpush1.msra.mxu0 0.0
        %850 = vmatprep.mubr.f32.mxu0 0.0
        %851 = vmatmul.mubr.f32.gmra.mrb[0].mxu0 %v704
        %v852 = vpop.f32.mrb[0].mxu0
        %v853 = vadd.f32 %v695, %v852
        %v854 = vpop.f32.mrb[0].mxu0
        %855 = vmatprep.mubr.f32.mxu0 0.0
        %856 = vmatmul.mubr.f32.gmra.mrb[0].mxu0 %v707
        %v857 = vpop.f32.mrb[0].mxu0
        %v858 = vadd.f32 %v700, %v857
        %v859 = vpop.f32.mrb[0].mxu0
        %860 = vdwg.mxu0
        %861 = vst [vmem:[%s257] sm:$0xff] %v776
        %862 = vst [vmem:[%s257 + $0x8] sm:$0xff] %v778
        %vm863 = vcmask 130048
        %864 = vst.msk [vmem:[%s257 + $0x10] sm:$0xff] %vm863, %v853
        %865 = vst [vmem:[%s257 + $0x18] sm:$0xff] %v782
        %866 = vst [vmem:[%s257 + $0x20] sm:$0xff] %v784
        %867 = vst.msk [vmem:[%s257 + $0x28] sm:$0xff] %vm863, %v858
        %s868 = sand.u32 %s160, 1
        %s869 = scalar_lea.sflag [#allocation4], %s868
        %s870 = sand.u32 %s160, 1
        %s871 = smul.addr %s870, 48
        %s872 = scalar_lea.vmem [#allocation5], %s871
        // Predicated region
        $region49: #{tpu_custom_call.1} parent=43 // pred_check
          %p873 = pneg %p170
        $region50: #{tpu_custom_call.1} parent=43 // pred_check_branch
          %875 = sbr.rel (%p873) target = $region52
        $region51: #{tpu_custom_call.1} parent=43 // pred_region
          %s877 = ssub.s32 768, 768
          %878 = vsyncadd %s869, %s877
          %s879 = smul.addr %s21, 6
          %s880 = smul.addr %s879, 128
          %s881 = scalar_lea.hbm %s6, %s880
          %s882 = sshll.u32 %s872, 4
          %s883 = int_to_ptr.vmem [resolvable:$true] %s882
          %888 = dma.vmem_to_hbm [thread:$0]  %s883, 768, %s881, %s869, 384, 384, 24
        $region52: #{tpu_custom_call.1} parent=43 // pred_fallthru
          _
      $region44: #{tpu_custom_call.1} parent=5 // pred_fallthru
        _
      %p889 = scmp.le.s32.totalorder 2, %s16
      // Predicated region
      $region53: #{tpu_custom_call.1} parent=5 // pred_check
        %p890 = pneg %p889
      $region54: #{tpu_custom_call.1} parent=5 // pred_check_branch
        %892 = sbr.rel (%p890) target = $region56
      $region55: #{tpu_custom_call.1} parent=5 // pred_region
        %s893 = ssub.s32 %s16, 2
        // Predicated region
        $region57: #{tpu_custom_call.1} parent=55 // pred_check
          %p894 = pneg %p176
        $region58: #{tpu_custom_call.1} parent=55 // pred_check_branch
          %896 = sbr.rel (%p894) target = $region60
        $region59: #{tpu_custom_call.1} parent=55 // pred_region
          %s897 = sand.u32 %s161, 1
          %s898 = scalar_lea.sflag [#allocation4], %s897
          %s899 = sand.u32 %s161, 1
          %s900 = smul.addr %s899, 48
          %s901 = scalar_lea.vmem [#allocation5], %s900
          %902 = dma.done %s898, 768
        $region60: #{tpu_custom_call.1} parent=55 // pred_fallthru
          _
      $region56: #{tpu_custom_call.1} parent=5 // pred_fallthru
        _
    $region6: #{tpu_custom_call.1} parent=1 // loop_footer
      %s20 = sadd.s32 1, %s16
    $region7: #{tpu_custom_call.1} parent=1 // loop_footer_branch
      %15 = sbr.rel target = $region3
    $region8: #{tpu_custom_call.1} parent=1 // loop_exit
      _
    %903 = vsyncpa [#allocation3], 1
    %s904 = scalar_lea.sflag [#allocation3], 1
    %905 = vsyncpa %s904, 1
    %906 = vsyncpa [#allocation4], 1
    %s907 = scalar_lea.sflag [#allocation4], 1
    %908 = vsyncpa %s907, 1

</llo_original>
